<compile_context>
chip_gen: v7x
topology: tpu7x:2x2x1
jax: 0.10.0
libtpu: 0.0.40
codegen_flags: <defaults>
</compile_context>

<pallas_src>
import numpy as np
import jax
import jax.numpy as jnp
from jax.experimental import pallas as pl
from jax.experimental.pallas import tpu as pltpu


EPS = 1e-5                 # nn.LayerNorm default eps
LANE = 128                 # TPU lane width
TARGET_BLOCK_BYTES = 2 << 20   # ~2 MiB input block; 4 double-buffers ~= 8 MiB


# -----------------------------------------------------------------------------
# Pallas kernel: LayerNorm over channels (sublanes), spatial on lanes
# -----------------------------------------------------------------------------
def _layernorm_kernel(x_ref, w_ref, b_ref, o_ref):
    # x_ref: (1, C, tile_t) block of the (B, C, H*W) slab; normalize over C.
    # w_ref / b_ref: (1, C, 1) per-channel affine params (broadcast along lanes).
    x = x_ref[0].astype(jnp.float32)                       # cast at load only
    mean = jnp.mean(x, axis=0, keepdims=True)              # (1, T) sublane reduce
    xc = x - mean
    var = jnp.mean(xc * xc, axis=0, keepdims=True)         # biased var (torch LN)
    inv = jax.lax.rsqrt(var + EPS)                         # EUP rsqrt (free slot)
    o_ref[0] = (xc * inv * w_ref[0] + b_ref[0]).astype(o_ref.dtype)


# -----------------------------------------------------------------------------
# Wrapper: NCHW in, NCHW out, no transposes / pads / extra HBM passes
# -----------------------------------------------------------------------------
def layer_norm_proxy(x_nchw, weight, bias):
    """LayerNormProxy forward: LayerNorm over C of an NCHW tensor, returns NCHW."""
    B, C, H, W = x_nchw.shape
    T = H * W
    x = x_nchw.reshape(B, C, T)                            # native dtype, no cast

    # --- tile_t sized from C to hit ~2 MiB blocks ----------------------------
    itemsize = jnp.dtype(x_nchw.dtype).itemsize
    tile_t = max(LANE, (TARGET_BLOCK_BYTES // (itemsize * C)) // LANE * LANE)
    # do not exceed the spatial extent (lane-rounded down; the overhang of the
    # last block is handled as a ragged, masked block by Pallas)
    tile_t = min(tile_t, max(LANE, (T // LANE) * LANE))
    # v7x megacore: guarantee >=2 parallel grid steps so both TCs stream HBM
    while B * pl.cdiv(T, tile_t) < 2 and tile_t > LANE:
        tile_t = max(LANE, (tile_t // 2) // LANE * LANE)
    num_t = pl.cdiv(T, tile_t)                             # ragged last block OK

    w = weight.reshape(1, C, 1).astype(jnp.float32)
    b = bias.reshape(1, C, 1).astype(jnp.float32)

    out = pl.pallas_call(
        _layernorm_kernel,
        out_shape=jax.ShapeDtypeStruct((B, C, T), x_nchw.dtype),
        grid_spec=pltpu.PrefetchScalarGridSpec(
            num_scalar_prefetch=0,
            grid=(B, num_t),
            in_specs=[
                pl.BlockSpec((1, C, tile_t), lambda bi, ti: (bi, 0, ti)),
                pl.BlockSpec((1, C, 1), lambda bi, ti: (0, 0, 0)),
                pl.BlockSpec((1, C, 1), lambda bi, ti: (0, 0, 0)),
            ],
            out_specs=pl.BlockSpec((1, C, tile_t), lambda bi, ti: (bi, 0, ti)),
        ),
        compiler_params=pltpu.CompilerParams(
            dimension_semantics=("parallel", "parallel"),
            vmem_limit_bytes=32 * 1024 * 1024),
    )(x, w, b)

    return out.reshape(B, C, H, W)


# -----------------------------------------------------------------------------
# Pure-numpy reference (direct transcription of the PyTorch module)
# -----------------------------------------------------------------------------
def _reference_numpy(x_nchw, weight, bias):
    x = np.transpose(np.asarray(x_nchw, np.float64), (0, 2, 3, 1))   # b c h w -> b h w c
    mean = x.mean(-1, keepdims=True)
    var = x.var(-1, keepdims=True)                                    # biased, like torch LN
    y = (x - mean) / np.sqrt(var + EPS)
    y = y * np.asarray(weight, np.float64) + np.asarray(bias, np.float64)
    return np.transpose(y, (0, 3, 1, 2)).astype(np.float32)           # b h w c -> b c h w


# -----------------------------------------------------------------------------
# Main
# -----------------------------------------------------------------------------
if __name__ == "__main__":
    key = jax.random.PRNGKey(0)
    k1, k2, k3, k4 = jax.random.split(key, 4)

    B, C, H, W = 2, 32, 16, 16          # dim = 32
    x = jax.random.normal(k1, (B, C, H, W), jnp.float32)
    # deterministic synthetic affine params (nn.LayerNorm weight/bias)
    weight = 1.0 + 0.1 * jax.random.normal(k2, (C,), jnp.float32)
    bias = 0.1 * jax.random.normal(k3, (C,), jnp.float32)

    fwd = jax.jit(layer_norm_proxy)

    # --- f32, lane-aligned spatial extent ------------------------------------
    y = jax.block_until_ready(fwd(x, weight, bias))
    y_ref = _reference_numpy(x, weight, bias)
    assert y.shape == y_ref.shape and y.dtype == x.dtype
    np.testing.assert_allclose(np.asarray(y), y_ref, rtol=1e-4, atol=1e-4)

    # --- f32, ragged spatial extent (H*W not a multiple of 128) --------------
    x2 = jax.random.normal(k4, (2, C, 12, 15), jnp.float32)
    y2 = jax.block_until_ready(fwd(x2, weight, bias))
    np.testing.assert_allclose(np.asarray(y2), _reference_numpy(x2, weight, bias),
                               rtol=1e-4, atol=1e-4)

    # --- bf16 I/O (f32 math inside the kernel, output dtype == input dtype) --
    xb = x.astype(jnp.bfloat16)
    yb = jax.block_until_ready(fwd(xb, weight, bias))
    assert yb.dtype == jnp.bfloat16
    yb_ref = _reference_numpy(np.asarray(xb).astype(np.float32), weight, bias)
    np.testing.assert_allclose(np.asarray(yb).astype(np.float32), yb_ref,
                               rtol=5e-2, atol=5e-2)

    print("KERNEL_OK")
</pallas_src>

<mosaic_0001>
module attributes {stable_mosaic.version = 11 : i64} {
  func.func @_layernorm_kernel(%arg0: i32, %arg1: i32, %arg2: memref<1x32x256xf32, #tpu.memory_space<vmem>>, %arg3: memref<1x32x1xf32, #tpu.memory_space<vmem>>, %arg4: memref<1x32x1xf32, #tpu.memory_space<vmem>>, %arg5: memref<1x32x256xf32, #tpu.memory_space<vmem>>) attributes {dimension_semantics = [#tpu.dimension_semantics<parallel>, #tpu.dimension_semantics<parallel>], iteration_bounds = array<i64: 2, 1>, scalar_prefetch = 0 : i64, scratch_operands = 0 : i64, tpu.core_type = #tpu.core_type<tc>, window_params = [{transform_indices = @transform_0, window_bounds = array<i64: 1, 32, 256>}, {pipeline_mode = #tpu.pipeline_mode<synchronous>, transform_indices = @transform_1, window_bounds = array<i64: 1, 32, 1>}, {pipeline_mode = #tpu.pipeline_mode<synchronous>, transform_indices = @transform_2, window_bounds = array<i64: 1, 32, 1>}, {transform_indices = @transform_3, window_bounds = array<i64: 1, 32, 256>}]} {
    %c0 = arith.constant 0 : index
    %c0_0 = arith.constant 0 : index
    %c0_1 = arith.constant 0 : index
    %0 = vector.load %arg2[%c0, %c0_0, %c0_1] : memref<1x32x256xf32, #tpu.memory_space<vmem>>, vector<1x32x256xf32>
    %1 = vector.shape_cast %0 : vector<1x32x256xf32> to vector<32x256xf32>
    %cst = arith.constant dense<0.000000e+00> : vector<256xf32>
    %2 = vector.multi_reduction <add>, %1, %cst [0] : vector<32x256xf32> to vector<256xf32>
    %3 = vector.shape_cast %2 : vector<256xf32> to vector<1x256xf32>
    %cst_2 = arith.constant 3.200000e+01 : f32
    %4 = vector.broadcast %cst_2 : f32 to vector<1x256xf32>
    %5 = arith.divf %3, %4 : vector<1x256xf32>
    %6 = vector.broadcast %5 : vector<1x256xf32> to vector<32x256xf32>
    %7 = arith.subf %1, %6 : vector<32x256xf32>
    %8 = arith.mulf %7, %7 : vector<32x256xf32>
    %cst_3 = arith.constant dense<0.000000e+00> : vector<256xf32>
    %9 = vector.multi_reduction <add>, %8, %cst_3 [0] : vector<32x256xf32> to vector<256xf32>
    %10 = vector.shape_cast %9 : vector<256xf32> to vector<1x256xf32>
    %cst_4 = arith.constant 3.200000e+01 : f32
    %11 = vector.broadcast %cst_4 : f32 to vector<1x256xf32>
    %12 = arith.divf %10, %11 : vector<1x256xf32>
    %cst_5 = arith.constant 9.99999974E-6 : f32
    %13 = vector.broadcast %cst_5 : f32 to vector<1x256xf32>
    %14 = arith.addf %12, %13 : vector<1x256xf32>
    %15 = math.rsqrt %14 : vector<1x256xf32>
    %16 = vector.broadcast %15 : vector<1x256xf32> to vector<32x256xf32>
    %17 = arith.mulf %7, %16 : vector<32x256xf32>
    %c0_6 = arith.constant 0 : index
    %c0_7 = arith.constant 0 : index
    %c0_8 = arith.constant 0 : index
    %18 = vector.load %arg3[%c0_6, %c0_7, %c0_8] : memref<1x32x1xf32, #tpu.memory_space<vmem>>, vector<1x32x1xf32>
    %19 = vector.shape_cast %18 : vector<1x32x1xf32> to vector<32x1xf32>
    %20 = vector.broadcast %19 : vector<32x1xf32> to vector<32x256xf32>
    %21 = arith.mulf %17, %20 : vector<32x256xf32>
    %c0_9 = arith.constant 0 : index
    %c0_10 = arith.constant 0 : index
    %c0_11 = arith.constant 0 : index
    %22 = vector.load %arg4[%c0_9, %c0_10, %c0_11] : memref<1x32x1xf32, #tpu.memory_space<vmem>>, vector<1x32x1xf32>
    %23 = vector.shape_cast %22 : vector<1x32x1xf32> to vector<32x1xf32>
    %24 = vector.broadcast %23 : vector<32x1xf32> to vector<32x256xf32>
    %25 = arith.addf %21, %24 : vector<32x256xf32>
    %c0_12 = arith.constant 0 : index
    %c0_13 = arith.constant 0 : index
    %c0_14 = arith.constant 0 : index
    %26 = vector.load %arg5[%c0_12, %c0_13, %c0_14] : memref<1x32x256xf32, #tpu.memory_space<vmem>>, vector<1x32x256xf32>
    %27 = vector.shape_cast %26 : vector<1x32x256xf32> to vector<32x256xf32>
    %28 = vector.shape_cast %25 : vector<32x256xf32> to vector<1x32x256xf32>
    tpu.vector_store %arg5[%c0_12, %c0_13, %c0_14], %28 {strides = array<i32>} : memref<1x32x256xf32, #tpu.memory_space<vmem>>, vector<1x32x256xf32>,
    return
  }
  func.func @transform_0(%arg0: i32, %arg1: i32) -> (i32, i32, i32) {
    %c0_i32 = arith.constant 0 : i32
    %c0_i32_0 = arith.constant 0 : i32
    return %arg0, %c0_i32, %arg1 : i32, i32, i32
  }
  func.func @transform_1(%arg0: i32, %arg1: i32) -> (i32, i32, i32) {
    %c0_i32 = arith.constant 0 : i32
    %c0_i32_0 = arith.constant 0 : i32
    %c0_i32_1 = arith.constant 0 : i32
    %c0_i32_2 = arith.constant 0 : i32
    return %c0_i32, %c0_i32_0, %c0_i32_1 : i32, i32, i32
  }
  func.func @transform_2(%arg0: i32, %arg1: i32) -> (i32, i32, i32) {
    %c0_i32 = arith.constant 0 : i32
    %c0_i32_0 = arith.constant 0 : i32
    %c0_i32_1 = arith.constant 0 : i32
    %c0_i32_2 = arith.constant 0 : i32
    return %c0_i32, %c0_i32_0, %c0_i32_1 : i32, i32, i32
  }
  func.func @transform_3(%arg0: i32, %arg1: i32) -> (i32, i32, i32) {
    %c0_i32 = arith.constant 0 : i32
    %c0_i32_0 = arith.constant 0 : i32
    return %arg0, %c0_i32, %arg1 : i32, i32, i32
  }
}

</mosaic_0001>

<llo_original>
// kernel: layer_norm_proxy.1
$region0: #{layer_norm_proxy.1}
  #allocation0 [shape = 'u32[]', space=smem, size = 0x4, offset = 0x4, fixed_abs, tag = 'smem constant byte address 0x4 - core index']
  #allocation1 [shape = 'u32[144,128]{1,0:T(1,128)}', space=vmem, size = 0x12000, scoped, tag = 'internal scratch']
  %s0 = inlined_call_operand.vmem [shape: f32[2,32,256], index: 0, kind: input, shape index: {}]
  %s1 = inlined_call_operand.vmem [shape: f32[1,32,1], index: 1, kind: input, shape index: {}]
  %s2 = inlined_call_operand.vmem [shape: f32[1,32,1], index: 2, kind: input, shape index: {}]
  %s3 = inlined_call_operand.vmem [shape: f32[2,32,256], index: 3, kind: output, shape index: {}]
  %s4 = sld [smem:[#allocation0]]
  $region45: #{layer_norm_proxy.1} parent=0
    _
  %s6 = ssub.s32 1, %s4
  %s7 = scalar_select 0, %s6, %s4
  loop: start=0, step=1, limit=4
  $region2: #{layer_norm_proxy.1} parent=0 // loop_pre_header
    _
  $region3: #{layer_norm_proxy.1} parent=0 // loop_header
    %s9 = sphi 0, %s13
    %p10 = scmp.ge.s32.totalorder %s9, 4
    %s16 = sphi 0, %s28
    %s17 = sphi 0, %s24
    %s18 = sphi 0, %s16
    %s19 = sphi 0, %s17
    %s20 = sphi 0, %s18
    %s21 = sphi 0, %s19
    %s33 = sphi 0, %s35
    %s36 = sphi 0, %s33
    %s37 = sphi 0, %s36
    %s53 = sphi 0, %s37
    %s57 = sphi 0, %s57
    %s59 = sphi 0, %s57
    %s60 = sphi 0, %s59
    %s74 = sphi 0, %s60
    %s78 = sphi 0, %s78
    %s80 = sphi 0, %s78
    %s81 = sphi 0, %s80
    %s95 = sphi 0, %s81
    %s103 = sphi 0, %s105
    %s106 = sphi 0, %s103
    %s107 = sphi 0, %s106
    %s123 = sphi 0, %s107
  $region4: #{layer_norm_proxy.1} parent=0 // loop_header_branch
    %12 = sbr.rel (%p10) target = $region8
  $region5: #{layer_norm_proxy.1} parent=0 // loop_body
    %s14 = ssub.s32 %s9, 1
    %s15 = ssub.s32 %s9, 2
    %s22 = sadd.s32 1, %s17
    %p23 = scmp.ge.s32.totalorder %s22, 1
    %s24 = scalar_select %p23, 0, %s22
    %s25 = sadd.s32 1, %s16
    %s26 = scalar_select %p23, %s25, %s16
    %p27 = scmp.ge.s32.totalorder %s26, 2
    %s28 = scalar_select %p27, 0, %s26
    %s29 = ssub.s32 %s16, %s28
    %s30 = ssub.s32 %s17, %s24
    %s31 = sor.u32 %s29, %s30
    %p32 = scmp.eq.s32.totalorder %s31, 0
    %s34 = sadd.s32 %s33, 1
    %s35 = scalar_select %p32, %s33, %s34
    %p38 = pneg %p32
    %p39 = scmp.eq.s32.totalorder %s9, 1
    %p40 = por %p38, %p39
    %p41 = scmp.ne.s32.totalorder %s33, %s36
    %p42 = scmp.eq.s32.totalorder %s9, 0
    %p43 = por %p41, %p42
    %p44 = scmp.ne.s32.totalorder %s33, %s36
    %p45 = scmp.eq.s32.totalorder %s14, 1
    %p46 = por %p44, %p45
    %p47 = scmp.ne.s32.totalorder %s36, %s37
    %p48 = scmp.eq.s32.totalorder %s14, 0
    %p49 = por %p47, %p48
    %p50 = scmp.ne.s32.totalorder %s36, %s37
    %p51 = scmp.eq.s32.totalorder %s15, 1
    %p52 = por %p50, %p51
    %p54 = scmp.ne.s32.totalorder %s37, %s53
    %p55 = scmp.eq.s32.totalorder %s15, 0
    %p56 = por %p54, %p55
    %s58 = sadd.s32 %s57, 1
    %p61 = scmp.eq.s32.totalorder %s9, 1
    %p62 = scmp.ne.s32.totalorder %s57, %s59
    %p63 = scmp.eq.s32.totalorder %s9, 0
    %p64 = por %p62, %p63
    %p65 = scmp.ne.s32.totalorder %s57, %s59
    %p66 = scmp.eq.s32.totalorder %s14, 1
    %p67 = por %p65, %p66
    %p68 = scmp.ne.s32.totalorder %s59, %s60
    %p69 = scmp.eq.s32.totalorder %s14, 0
    %p70 = por %p68, %p69
    %p71 = scmp.ne.s32.totalorder %s59, %s60
    %p72 = scmp.eq.s32.totalorder %s15, 1
    %p73 = por %p71, %p72
    %p75 = scmp.ne.s32.totalorder %s60, %s74
    %p76 = scmp.eq.s32.totalorder %s15, 0
    %p77 = por %p75, %p76
    %s79 = sadd.s32 %s78, 1
    %p82 = scmp.eq.s32.totalorder %s9, 1
    %p83 = scmp.ne.s32.totalorder %s78, %s80
    %p84 = scmp.eq.s32.totalorder %s9, 0
    %p85 = por %p83, %p84
    %p86 = scmp.ne.s32.totalorder %s78, %s80
    %p87 = scmp.eq.s32.totalorder %s14, 1
    %p88 = por %p86, %p87
    %p89 = scmp.ne.s32.totalorder %s80, %s81
    %p90 = scmp.eq.s32.totalorder %s14, 0
    %p91 = por %p89, %p90
    %p92 = scmp.ne.s32.totalorder %s80, %s81
    %p93 = scmp.eq.s32.totalorder %s15, 1
    %p94 = por %p92, %p93
    %p96 = scmp.ne.s32.totalorder %s81, %s95
    %p97 = scmp.eq.s32.totalorder %s15, 0
    %p98 = por %p96, %p97
    %s99 = ssub.s32 %s16, %s28
    %s100 = ssub.s32 %s17, %s24
    %s101 = sor.u32 %s99, %s100
    %p102 = scmp.eq.s32.totalorder %s101, 0
    %s104 = sadd.s32 %s103, 1
    %s105 = scalar_select %p102, %s103, %s104
    %p108 = pneg %p102
    %p109 = scmp.eq.s32.totalorder %s9, 1
    %p110 = por %p108, %p109
    %p111 = scmp.ne.s32.totalorder %s103, %s106
    %p112 = scmp.eq.s32.totalorder %s9, 0
    %p113 = por %p111, %p112
    %p114 = scmp.ne.s32.totalorder %s103, %s106
    %p115 = scmp.eq.s32.totalorder %s14, 1
    %p116 = por %p114, %p115
    %p117 = scmp.ne.s32.totalorder %s106, %s107
    %p118 = scmp.eq.s32.totalorder %s14, 0
    %p119 = por %p117, %p118
    %p120 = scmp.ne.s32.totalorder %s106, %s107
    %p121 = scmp.eq.s32.totalorder %s15, 1
    %p122 = por %p120, %p121
    %p124 = scmp.ne.s32.totalorder %s107, %s123
    %p125 = scmp.eq.s32.totalorder %s15, 0
    %p126 = por %p124, %p125
    %p127 = scmp.le.s32.totalorder 1, %s9
    %p128 = scmp.lt.s32.totalorder %s9, 3
    %p129 = pnand %p127, %p128
    %p130 = pneg %p129
    // Predicated region
    $region9: #{layer_norm_proxy.1} parent=5 // pred_check
      _
    $region10: #{layer_norm_proxy.1} parent=5 // pred_check_branch
      %132 = sbr.rel (%p129) target = $region12
    $region11: #{layer_norm_proxy.1} parent=5 // pred_region
      %s133 = ssub.s32 %s9, 1
      // Predicated region
      $region13: #{layer_norm_proxy.1} parent=11 // pred_check
        %p134 = pneg %p70
      $region14: #{layer_norm_proxy.1} parent=11 // pred_check_branch
        %136 = sbr.rel (%p134) target = $region16
      $region15: #{layer_norm_proxy.1} parent=11 // pred_region
        _
      $region16: #{layer_norm_proxy.1} parent=11 // pred_fallthru
        _
      // Predicated region
      $region17: #{layer_norm_proxy.1} parent=11 // pred_check
        %p137 = pneg %p91
      $region18: #{layer_norm_proxy.1} parent=11 // pred_check_branch
        %139 = sbr.rel (%p137) target = $region20
      $region19: #{layer_norm_proxy.1} parent=11 // pred_region
        _
      $region20: #{layer_norm_proxy.1} parent=11 // pred_fallthru
        _
    $region12: #{layer_norm_proxy.1} parent=5 // pred_fallthru
      _
    %p140 = scmp.lt.s32.totalorder %s9, 2
    // Predicated region
    $region21: #{layer_norm_proxy.1} parent=5 // pred_check
      %p141 = pneg %p140
    $region22: #{layer_norm_proxy.1} parent=5 // pred_check_branch
      %143 = sbr.rel (%p141) target = $region24
    $region23: #{layer_norm_proxy.1} parent=5 // pred_region
      // Predicated region
      $region25: #{layer_norm_proxy.1} parent=23 // pred_check
        %p144 = pneg %p43
      $region26: #{layer_norm_proxy.1} parent=23 // pred_check_branch
        %146 = sbr.rel (%p144) target = $region28
      $region27: #{layer_norm_proxy.1} parent=23 // pred_region
        %s147 = smul.u32 2, %s17
        %p148 = scmp.lt.s32.totalorder %s16, 1
        %s149 = scalar_select %p148, %s16, 1
        %p150 = scmp.lt.s32.totalorder %s147, 1
        %s151 = scalar_select %p150, %s147, 1
        %s152 = smul.addr %s149, 8
        %s153 = sadd.s32 %s151, %s152
        %s154 = smul.addr %s153, 8
        %s155 = scalar_lea.vmem %s0, %s154
        %s156 = smul.u32 2, %s17
      $region28: #{layer_norm_proxy.1} parent=23 // pred_fallthru
        _
    $region24: #{layer_norm_proxy.1} parent=5 // pred_fallthru
      _
    %p157 = scmp.le.s32.totalorder 1, %s9
    %p158 = scmp.lt.s32.totalorder %s9, 3
    %p159 = pnand %p157, %p158
    %p160 = pneg %p159
    // Predicated region
    $region29: #{layer_norm_proxy.1} parent=5 // pred_check
      _
    $region30: #{layer_norm_proxy.1} parent=5 // pred_check_branch
      %162 = sbr.rel (%p159) target = $region32
    $region31: #{layer_norm_proxy.1} parent=5 // pred_region
      %s163 = ssub.s32 %s9, 1
      %s164 = smul.u32 2, %s19
      %p165 = scmp.lt.s32.totalorder %s18, 1
      %s166 = scalar_select %p165, %s18, 1
      %p167 = scmp.lt.s32.totalorder %s164, 1
      %s168 = scalar_select %p167, %s164, 1
      %s169 = smul.addr %s166, 8
      %s170 = sadd.s32 %s168, %s169
      %s171 = smul.addr %s170, 8
      %s172 = scalar_lea.vmem %s0, %s171
      %p173 = pneg %p49
      %p174 = pneg %p46
      %p175 = pneg %p70
      %p176 = pneg %p67
      %p177 = pneg %p91
      %p178 = pneg %p88
      %p179 = pneg %p119
      %p180 = pneg %p116
      %s181 = smul.u32 2, %s19
      %p182 = scmp.lt.s32.totalorder %s18, 1
      %s183 = scalar_select %p182, %s18, 1
      %p184 = scmp.lt.s32.totalorder %s181, 1
      %s185 = scalar_select %p184, %s181, 1
      %s186 = smul.addr %s183, 8
      %s187 = sadd.s32 %s185, %s186
      %s188 = smul.addr %s187, 8
      %s189 = scalar_lea.vmem %s3, %s188
      %s190 = smul.u32 2, %s19
      %p191 = scmp.lt.s32.totalorder %s18, 1
      %s192 = scalar_select %p191, %s18, 1
      %p193 = scmp.lt.s32.totalorder %s190, 1
      %s194 = scalar_select %p193, %s190, 1
      %s195 = smul.addr %s192, 8
      %s196 = sadd.s32 %s194, %s195
      %s197 = smul.addr %s196, 8
      %s198 = scalar_lea.vmem %s0, %s197
      %s199 = smul.u32 2, %s19
      %s200 = smul.u32 2, %s19
      %p201 = scmp.lt.s32.totalorder %s18, 1
      %s202 = scalar_select %p201, %s18, 1
      %p203 = scmp.lt.s32.totalorder %s200, 1
      %s204 = scalar_select %p203, %s200, 1
      %s205 = smul.addr %s202, 8
      %s206 = sadd.s32 %s204, %s205
      %s207 = smul.addr %s206, 8
      %s208 = scalar_lea.vmem %s3, %s207
      %s209 = smul.u32 2, %s19
      %v210 = vld [vmem:[%s198] sm:$0xff]
      %v211 = vld [vmem:[%s198 + $0x8] sm:$0xff]
      %v212 = vld [vmem:[%s198 + $0x10] sm:$0xff]
      %v213 = vld [vmem:[%s198 + $0x18] sm:$0xff]
      %v214 = vld [vmem:[%s198 + $0x20] sm:$0xff]
      %v215 = vld [vmem:[%s198 + $0x28] sm:$0xff]
      %v216 = vld [vmem:[%s198 + $0x30] sm:$0xff]
      %v217 = vld [vmem:[%s198 + $0x38] sm:$0xff]
      %v218 = vadd.f32 %v210, %v212
      %v219 = vadd.f32 %v218, %v214
      %v220 = vadd.f32 %v219, %v216
      %v221 = vrot.slane %v220, 4
      %v222 = vadd.f32 %v220, %v221
      %v223 = vrot.slane %v222, 2
      %v224 = vadd.f32 %v222, %v223
      %v225 = vrot.slane %v224, 1
      %v226 = vadd.f32 %v224, %v225
      %v227 = vadd.f32 %v211, %v213
      %v228 = vadd.f32 %v227, %v215
      %v229 = vadd.f32 %v228, %v217
      %v230 = vrot.slane %v229, 4
      %v231 = vadd.f32 %v229, %v230
      %v232 = vrot.slane %v231, 2
      %v233 = vadd.f32 %v231, %v232
      %v234 = vrot.slane %v233, 1
      %v235 = vadd.f32 %v233, %v234
      %v236 = vrcp.pop 32.0
      %v237 = vmul.f32 %v226, %v236
      %v238 = vmul.f32 %v235, %v236
      %v239 = vsub.f32 %v210, %v237
      %v240 = vsub.f32 %v211, %v238
      %v241 = vsub.f32 %v212, %v237
      %v242 = vsub.f32 %v213, %v238
      %v243 = vsub.f32 %v214, %v237
      %v244 = vsub.f32 %v215, %v238
      %v245 = vsub.f32 %v216, %v237
      %v246 = vsub.f32 %v217, %v238
      %v247 = vmul.f32 %v239, %v239
      %v248 = vmul.f32 %v240, %v240
      %v249 = vmul.f32 %v241, %v241
      %v250 = vmul.f32 %v242, %v242
      %v251 = vmul.f32 %v243, %v243
      %v252 = vmul.f32 %v244, %v244
      %v253 = vmul.f32 %v245, %v245
      %v254 = vmul.f32 %v246, %v246
      %v255 = vadd.f32 %v247, %v249
      %v256 = vadd.f32 %v255, %v251
      %v257 = vadd.f32 %v256, %v253
      %v258 = vrot.slane %v257, 4
      %v259 = vadd.f32 %v257, %v258
      %v260 = vrot.slane %v259, 2
      %v261 = vadd.f32 %v259, %v260
      %v262 = vrot.slane %v261, 1
      %v263 = vadd.f32 %v261, %v262
      %v264 = vadd.f32 %v248, %v250
      %v265 = vadd.f32 %v264, %v252
      %v266 = vadd.f32 %v265, %v254
      %v267 = vrot.slane %v266, 4
      %v268 = vadd.f32 %v266, %v267
      %v269 = vrot.slane %v268, 2
      %v270 = vadd.f32 %v268, %v269
      %v271 = vrot.slane %v270, 1
      %v272 = vadd.f32 %v270, %v271
      %v273 = vmul.f32 %v263, %v236
      %v274 = vmul.f32 %v272, %v236
      %v275 = vadd.f32 %v273, 1e-05
      %v276 = vadd.f32 %v274, 1e-05
      %v277 = vrsqrt.pop %v275
      %v278 = vrsqrt.pop %v276
      %v279 = vmul.f32 %v239, %v277
      %v280 = vmul.f32 %v240, %v278
      %v281 = vmul.f32 %v241, %v277
      %v282 = vmul.f32 %v242, %v278
      %v283 = vmul.f32 %v243, %v277
      %v284 = vmul.f32 %v244, %v278
      %v285 = vmul.f32 %v245, %v277
      %v286 = vmul.f32 %v246, %v278
      %v287 = vld [vmem:[%s1] sm:$0xff]
      %v288 = vld [vmem:[%s1 + $0x8] sm:$0xff]
      %v289 = vld [vmem:[%s1 + $0x10] sm:$0xff]
      %v290 = vld [vmem:[%s1 + $0x18] sm:$0xff]
      %292 = vset.pattern.permute.xlu0 0
      %293 = vperm.xlu0 %292, %v287
      %v294 = vpop.permute.xlu0 %293
      %297 = vset.pattern.permute.xlu0 0
      %298 = vperm.xlu0 %297, %v288
      %v299 = vpop.permute.xlu0 %298
      %302 = vset.pattern.permute.xlu0 0
      %303 = vperm.xlu0 %302, %v289
      %v304 = vpop.permute.xlu0 %303
      %307 = vset.pattern.permute.xlu0 0
      %308 = vperm.xlu0 %307, %v290
      %v309 = vpop.permute.xlu0 %308
      %v311 = vmul.f32 %v279, %v294
      %v312 = vmul.f32 %v280, %v294
      %v313 = vmul.f32 %v281, %v299
      %v314 = vmul.f32 %v282, %v299
      %v315 = vmul.f32 %v283, %v304
      %v316 = vmul.f32 %v284, %v304
      %v317 = vmul.f32 %v285, %v309
      %v318 = vmul.f32 %v286, %v309
      %v319 = vld [vmem:[%s2] sm:$0xff]
      %v320 = vld [vmem:[%s2 + $0x8] sm:$0xff]
      %v321 = vld [vmem:[%s2 + $0x10] sm:$0xff]
      %v322 = vld [vmem:[%s2 + $0x18] sm:$0xff]
      %324 = vset.pattern.permute.xlu0 0
      %325 = vperm.xlu0 %324, %v319
      %v326 = vpop.permute.xlu0 %325
      %329 = vset.pattern.permute.xlu0 0
      %330 = vperm.xlu0 %329, %v320
      %v331 = vpop.permute.xlu0 %330
      %334 = vset.pattern.permute.xlu0 0
      %335 = vperm.xlu0 %334, %v321
      %v336 = vpop.permute.xlu0 %335
      %339 = vset.pattern.permute.xlu0 0
      %340 = vperm.xlu0 %339, %v322
      %v341 = vpop.permute.xlu0 %340
      %v343 = vadd.f32 %v311, %v326
      %v344 = vadd.f32 %v312, %v326
      %v345 = vadd.f32 %v313, %v331
      %v346 = vadd.f32 %v314, %v331
      %v347 = vadd.f32 %v315, %v336
      %v348 = vadd.f32 %v316, %v336
      %v349 = vadd.f32 %v317, %v341
      %v350 = vadd.f32 %v318, %v341
      %351 = vst [vmem:[%s208] sm:$0xff] %v343
      %352 = vst [vmem:[%s208 + $0x8] sm:$0xff] %v344
      %353 = vst [vmem:[%s208 + $0x10] sm:$0xff] %v345
      %354 = vst [vmem:[%s208 + $0x18] sm:$0xff] %v346
      %355 = vst [vmem:[%s208 + $0x20] sm:$0xff] %v347
      %356 = vst [vmem:[%s208 + $0x28] sm:$0xff] %v348
      %357 = vst [vmem:[%s208 + $0x30] sm:$0xff] %v349
      %358 = vst [vmem:[%s208 + $0x38] sm:$0xff] %v350
      %s359 = smul.u32 2, %s19
      %p360 = scmp.lt.s32.totalorder %s18, 1
      %s361 = scalar_select %p360, %s18, 1
      %p362 = scmp.lt.s32.totalorder %s359, 1
      %s363 = scalar_select %p362, %s359, 1
      %s364 = smul.addr %s361, 8
      %s365 = sadd.s32 %s363, %s364
      %s366 = smul.addr %s365, 8
      %s367 = scalar_lea.vmem %s3, %s366
      // Predicated region
      $region33: #{layer_norm_proxy.1} parent=31 // pred_check
        %p368 = pneg %p116
      $region34: #{layer_norm_proxy.1} parent=31 // pred_check_branch
        %370 = sbr.rel (%p368) target = $region36
      $region35: #{layer_norm_proxy.1} parent=31 // pred_region
        %s371 = smul.u32 2, %s19
      $region36: #{layer_norm_proxy.1} parent=31 // pred_fallthru
        _
    $region32: #{layer_norm_proxy.1} parent=5 // pred_fallthru
      _
    %p372 = scmp.le.s32.totalorder 2, %s9
    // Predicated region
    $region37: #{layer_norm_proxy.1} parent=5 // pred_check
      %p373 = pneg %p372
    $region38: #{layer_norm_proxy.1} parent=5 // pred_check_branch
      %375 = sbr.rel (%p373) target = $region40
    $region39: #{layer_norm_proxy.1} parent=5 // pred_region
      %s376 = ssub.s32 %s9, 2
      // Predicated region
      $region41: #{layer_norm_proxy.1} parent=39 // pred_check
        %p377 = pneg %p122
      $region42: #{layer_norm_proxy.1} parent=39 // pred_check_branch
        %379 = sbr.rel (%p377) target = $region44
      $region43: #{layer_norm_proxy.1} parent=39 // pred_region
        %s380 = smul.u32 2, %s21
        %p381 = scmp.lt.s32.totalorder %s20, 1
        %s382 = scalar_select %p381, %s20, 1
        %p383 = scmp.lt.s32.totalorder %s380, 1
        %s384 = scalar_select %p383, %s380, 1
        %s385 = smul.addr %s382, 8
        %s386 = sadd.s32 %s384, %s385
        %s387 = smul.addr %s386, 8
        %s388 = scalar_lea.vmem %s3, %s387
      $region44: #{layer_norm_proxy.1} parent=39 // pred_fallthru
        _
    $region40: #{layer_norm_proxy.1} parent=5 // pred_fallthru
      _
  $region6: #{layer_norm_proxy.1} parent=0 // loop_footer
    %s13 = sadd.s32 1, %s9
  $region7: #{layer_norm_proxy.1} parent=0 // loop_footer_branch
    %8 = sbr.rel target = $region3
  $region8: #{layer_norm_proxy.1} parent=0 // loop_exit
    _

</llo_original>
